<compile_context>
chip_gen: v7x
topology: tpu7x:2x2x1
jax: 0.10.0
libtpu: 0.0.40
codegen_flags: <defaults>
</compile_context>

<pallas_src>
import functools

import jax
import jax.numpy as jnp
from jax.experimental import pallas as pl
from jax.experimental.pallas import tpu as pltpu


def _encoder_kernel(x_ref, shifts_ref, w1_ref, b1_ref, w2_ref, b2_ref,
                    wf_ref, bf_ref, out_ref, *, kernel_size):
    """Single-invocation encoder kernel.

    Shapes:
      x_ref      : (B*L, Cin)      flattened input, channels-last
      shifts_ref : (K, B*L, B*L)   0/1 shift matrices; slice k maps row i ->
                                   row i + (k - K//2), zero at batch boundaries
      w1_ref     : (K*Cin, C1)     conv1 weight, im2col layout
      b1_ref     : (1, C1)
      w2_ref     : (K*C1, C2)      conv2 weight, im2col layout
      b2_ref     : (1, C2)
      wf_ref     : (C2, Cin)       fc weight (transposed vs torch)
      bf_ref     : (1, Cin)
      out_ref    : (B*L, Cin)
    """
    K = kernel_size
    pad = K // 2

    def conv_same(h, w_ref_):
        # im2col: concatenate the K shifted views along the lane (channel) axis,
        # then a single MXU matmul against the (K*C, C_out) weight.
        cols = []
        for k in range(K):                       # K is small & static
            if k == pad:
                cols.append(h)                   # zero shift: use h directly
            else:
                cols.append(jnp.dot(shifts_ref[k], h,
                                    preferred_element_type=jnp.float32))
        hc = jnp.concatenate(cols, axis=-1)      # (B*L, K*C)
        return jnp.dot(hc, w_ref_[...], preferred_element_type=jnp.float32)

    x = x_ref[...]

    h1 = jnp.maximum(conv_same(x, w1_ref) + b1_ref[...], 0.0)    # (B*L, C1)
    h2 = jnp.maximum(conv_same(h1, w2_ref) + b2_ref[...], 0.0)   # (B*L, C2)
    y = jnp.dot(h2, wf_ref[...], preferred_element_type=jnp.float32) + bf_ref[...]
    out_ref[...] = y.astype(out_ref.dtype)


def _shift_matrices(B, L, K):
    """(K, B*L, B*L) 0/1 matrices implementing per-batch 'same'-padded shifts.

    Slice k, applied as S_k @ h, yields row i = h[i + (k - K//2)] when the
    source row lies inside the same batch element, else 0 (the zero padding).
    """
    BL = B * L
    pad = K // 2
    pos = jnp.arange(BL) % L
    mats = []
    for k in range(K):
        s = k - pad
        valid = ((pos + s) >= 0) & ((pos + s) < L)
        mats.append(jnp.eye(BL, k=s, dtype=jnp.float32)
                    * valid[:, None].astype(jnp.float32))
    return jnp.stack(mats, axis=0)


def cnn1d_encoder(x, w1, b1, w2, b2, wf, bf, kernel_size=3):
    """x: (B, L, input_size) float32.  Returns (B, L, input_size).

    Weight layouts (equivalent to the PyTorch module's parameters):
      w1: (K, Cin, C1)  == conv1.weight transposed to (k, in, out)
      w2: (K, C1, C2)   == conv2.weight transposed to (k, in, out)
      wf: (C2, Cin)     == fc.weight.T
    """
    B, L, Cin = x.shape
    K = kernel_size
    C1 = w1.shape[2]
    C2 = w2.shape[2]
    BL = B * L

    x2d = x.reshape(BL, Cin)                 # fold batch into matmul M dim
    shifts = _shift_matrices(B, L, K)
    w1r = w1.reshape(K * Cin, C1)            # im2col weight layout
    w2r = w2.reshape(K * C1, C2)
    b1r = b1.reshape(1, C1)
    b2r = b2.reshape(1, C2)
    bfr = bf.reshape(1, Cin)

    out = pl.pallas_call(
        functools.partial(_encoder_kernel, kernel_size=K),
        out_shape=jax.ShapeDtypeStruct((BL, Cin), jnp.float32),
        in_specs=[pl.BlockSpec(memory_space=pltpu.MemorySpace.VMEM)
                  for _ in range(8)],
        out_specs=pl.BlockSpec(memory_space=pltpu.MemorySpace.VMEM),
    )(x2d, shifts, w1r, b1r, w2r, b2r, wf, bfr)

    return out.reshape(B, L, Cin)


def _reference(x, w1, b1, w2, b2, wf, bf, kernel_size=3):
    """Pure-JAX reference matching the PyTorch forward (channels-last)."""
    K = kernel_size
    pad = K // 2
    B, L, Cin = x.shape

    def same_conv(h, w, b):  # h: (B, L, Ci), w: (K, Ci, Co)
        hp = jnp.pad(h, ((0, 0), (pad, pad), (0, 0)))
        acc = jnp.zeros((B, L, w.shape[2]), jnp.float32) + b
        for k in range(K):
            acc = acc + jnp.einsum('bli,io->blo', hp[:, k:k + L, :], w[k])
        return acc

    h1 = jax.nn.relu(same_conv(x, w1, b1))
    h2 = jax.nn.relu(same_conv(h1, w2, b2))
    return jnp.einsum('blc,co->blo', h2, wf) + bf


if __name__ == "__main__":
    # Small shapes consistent with the module: input_size=8, num_channels=16,
    # kernel_size=3, batch=2, seq_len=16.
    B, L = 2, 16
    input_size, num_channels, K = 8, 16, 3
    C1, C2 = num_channels, num_channels * 2

    key = jax.random.PRNGKey(0)
    k_x, k_w1, k_b1, k_w2, k_b2, k_wf, k_bf = jax.random.split(key, 7)

    x = jax.random.normal(k_x, (B, L, input_size), dtype=jnp.float32)

    # Deterministic parameter init (shapes follow nn.Conv1d / nn.Linear):
    #   conv weight (out, in, K) stored here as (K, in, out) for matmul form.
    w1 = 0.1 * jax.random.normal(k_w1, (K, input_size, C1), dtype=jnp.float32)
    b1 = 0.1 * jax.random.normal(k_b1, (C1,), dtype=jnp.float32)
    w2 = 0.1 * jax.random.normal(k_w2, (K, C1, C2), dtype=jnp.float32)
    b2 = 0.1 * jax.random.normal(k_b2, (C2,), dtype=jnp.float32)
    # fc: Linear(C2 -> input_size); stored as (C2, input_size) i.e. W.T
    wf = 0.1 * jax.random.normal(k_wf, (C2, input_size), dtype=jnp.float32)
    bf = 0.1 * jax.random.normal(k_bf, (input_size,), dtype=jnp.float32)

    out = cnn1d_encoder(x, w1, b1, w2, b2, wf, bf, kernel_size=K)
    out = jax.block_until_ready(out)

    ref = _reference(x, w1, b1, w2, b2, wf, bf, kernel_size=K)
    assert out.shape == (B, L, input_size)
    assert jnp.allclose(out, ref, atol=1e-4, rtol=1e-4), "mismatch vs reference"

    print("KERNEL_OK")
</pallas_src>

<mosaic_0001>
module attributes {stable_mosaic.version = 11 : i64} {
  func.func @_encoder_kernel(%arg0: memref<32x8xf32, #tpu.memory_space<vmem>>, %arg1: memref<3x32x32xf32, #tpu.memory_space<vmem>>, %arg2: memref<24x16xf32, #tpu.memory_space<vmem>>, %arg3: memref<1x16xf32, #tpu.memory_space<vmem>>, %arg4: memref<48x32xf32, #tpu.memory_space<vmem>>, %arg5: memref<1x32xf32, #tpu.memory_space<vmem>>, %arg6: memref<32x8xf32, #tpu.memory_space<vmem>>, %arg7: memref<1x8xf32, #tpu.memory_space<vmem>>, %arg8: memref<32x8xf32, #tpu.memory_space<vmem>>) attributes {dimension_semantics = [], scalar_prefetch = 0 : i64, scratch_operands = 0 : i64, tpu.core_type = #tpu.core_type<tc>} {
    %c0 = arith.constant 0 : index
    %c0_0 = arith.constant 0 : index
    %0 = vector.load %arg0[%c0, %c0_0] : memref<32x8xf32, #tpu.memory_space<vmem>>, vector<32x8xf32>
    %c0_1 = arith.constant 0 : index
    %c0_2 = arith.constant 0 : index
    %c0_3 = arith.constant 0 : index
    %1 = vector.load %arg1[%c0_1, %c0_2, %c0_3] : memref<3x32x32xf32, #tpu.memory_space<vmem>>, vector<1x32x32xf32>
    %2 = vector.shape_cast %1 : vector<1x32x32xf32> to vector<32x32xf32>
    %cst = arith.constant dense<0.000000e+00> : vector<32x8xf32>
    %3 = tpu.matmul %2, %0, %cst {dimension_numbers = #tpu.dot_dimension_numbers<[1], [0], [0], [1], [0, 0, 1, 1], [], []>} : vector<32x32xf32>, vector<32x8xf32>, vector<32x8xf32> -> vector<32x8xf32>
    %c2 = arith.constant 2 : index
    %c0_4 = arith.constant 0 : index
    %c0_5 = arith.constant 0 : index
    %4 = vector.load %arg1[%c2, %c0_4, %c0_5] : memref<3x32x32xf32, #tpu.memory_space<vmem>>, vector<1x32x32xf32>
    %5 = vector.shape_cast %4 : vector<1x32x32xf32> to vector<32x32xf32>
    %cst_6 = arith.constant dense<0.000000e+00> : vector<32x8xf32>
    %6 = tpu.matmul %5, %0, %cst_6 {dimension_numbers = #tpu.dot_dimension_numbers<[1], [0], [0], [1], [0, 0, 1, 1], [], []>} : vector<32x32xf32>, vector<32x8xf32>, vector<32x8xf32> -> vector<32x8xf32>
    %7 = tpu.concatenate %3, %0, %6 in 1 : vector<32x8xf32>, vector<32x8xf32>, vector<32x8xf32> -> vector<32x24xf32>
    %c0_7 = arith.constant 0 : index
    %c0_8 = arith.constant 0 : index
    %8 = vector.load %arg2[%c0_7, %c0_8] : memref<24x16xf32, #tpu.memory_space<vmem>>, vector<24x16xf32>
    %cst_9 = arith.constant dense<0.000000e+00> : vector<32x16xf32>
    %9 = tpu.matmul %7, %8, %cst_9 {dimension_numbers = #tpu.dot_dimension_numbers<[1], [0], [0], [1], [0, 0, 1, 1], [], []>} : vector<32x24xf32>, vector<24x16xf32>, vector<32x16xf32> -> vector<32x16xf32>
    %c0_10 = arith.constant 0 : index
    %c0_11 = arith.constant 0 : index
    %10 = vector.load %arg3[%c0_10, %c0_11] : memref<1x16xf32, #tpu.memory_space<vmem>>, vector<1x16xf32>
    %11 = vector.broadcast %10 : vector<1x16xf32> to vector<32x16xf32>
    %12 = arith.addf %9, %11 : vector<32x16xf32>
    %cst_12 = arith.constant 0.000000e+00 : f32
    %13 = vector.broadcast %cst_12 : f32 to vector<32x16xf32>
    %14 = arith.maximumf %12, %13 : vector<32x16xf32>
    %c0_13 = arith.constant 0 : index
    %c0_14 = arith.constant 0 : index
    %c0_15 = arith.constant 0 : index
    %15 = vector.load %arg1[%c0_13, %c0_14, %c0_15] : memref<3x32x32xf32, #tpu.memory_space<vmem>>, vector<1x32x32xf32>
    %16 = vector.shape_cast %15 : vector<1x32x32xf32> to vector<32x32xf32>
    %cst_16 = arith.constant dense<0.000000e+00> : vector<32x16xf32>
    %17 = tpu.matmul %16, %14, %cst_16 {dimension_numbers = #tpu.dot_dimension_numbers<[1], [0], [0], [1], [0, 0, 1, 1], [], []>} : vector<32x32xf32>, vector<32x16xf32>, vector<32x16xf32> -> vector<32x16xf32>
    %c2_17 = arith.constant 2 : index
    %c0_18 = arith.constant 0 : index
    %c0_19 = arith.constant 0 : index
    %18 = vector.load %arg1[%c2_17, %c0_18, %c0_19] : memref<3x32x32xf32, #tpu.memory_space<vmem>>, vector<1x32x32xf32>
    %19 = vector.shape_cast %18 : vector<1x32x32xf32> to vector<32x32xf32>
    %cst_20 = arith.constant dense<0.000000e+00> : vector<32x16xf32>
    %20 = tpu.matmul %19, %14, %cst_20 {dimension_numbers = #tpu.dot_dimension_numbers<[1], [0], [0], [1], [0, 0, 1, 1], [], []>} : vector<32x32xf32>, vector<32x16xf32>, vector<32x16xf32> -> vector<32x16xf32>
    %21 = tpu.concatenate %17, %14, %20 in 1 : vector<32x16xf32>, vector<32x16xf32>, vector<32x16xf32> -> vector<32x48xf32>
    %c0_21 = arith.constant 0 : index
    %c0_22 = arith.constant 0 : index
    %22 = vector.load %arg4[%c0_21, %c0_22] : memref<48x32xf32, #tpu.memory_space<vmem>>, vector<48x32xf32>
    %cst_23 = arith.constant dense<0.000000e+00> : vector<32x32xf32>
    %23 = tpu.matmul %21, %22, %cst_23 {dimension_numbers = #tpu.dot_dimension_numbers<[1], [0], [0], [1], [0, 0, 1, 1], [], []>} : vector<32x48xf32>, vector<48x32xf32>, vector<32x32xf32> -> vector<32x32xf32>
    %c0_24 = arith.constant 0 : index
    %c0_25 = arith.constant 0 : index
    %24 = vector.load %arg5[%c0_24, %c0_25] : memref<1x32xf32, #tpu.memory_space<vmem>>, vector<1x32xf32>
    %25 = vector.broadcast %24 : vector<1x32xf32> to vector<32x32xf32>
    %26 = arith.addf %23, %25 : vector<32x32xf32>
    %cst_26 = arith.constant 0.000000e+00 : f32
    %27 = vector.broadcast %cst_26 : f32 to vector<32x32xf32>
    %28 = arith.maximumf %26, %27 : vector<32x32xf32>
    %c0_27 = arith.constant 0 : index
    %c0_28 = arith.constant 0 : index
    %29 = vector.load %arg6[%c0_27, %c0_28] : memref<32x8xf32, #tpu.memory_space<vmem>>, vector<32x8xf32>
    %cst_29 = arith.constant dense<0.000000e+00> : vector<32x8xf32>
    %30 = tpu.matmul %28, %29, %cst_29 {dimension_numbers = #tpu.dot_dimension_numbers<[1], [0], [0], [1], [0, 0, 1, 1], [], []>} : vector<32x32xf32>, vector<32x8xf32>, vector<32x8xf32> -> vector<32x8xf32>
    %c0_30 = arith.constant 0 : index
    %c0_31 = arith.constant 0 : index
    %31 = vector.load %arg7[%c0_30, %c0_31] : memref<1x8xf32, #tpu.memory_space<vmem>>, vector<1x8xf32>
    %32 = vector.broadcast %31 : vector<1x8xf32> to vector<32x8xf32>
    %33 = arith.addf %30, %32 : vector<32x8xf32>
    %c0_32 = arith.constant 0 : index
    %c0_33 = arith.constant 0 : index
    %34 = vector.load %arg8[%c0_32, %c0_33] : memref<32x8xf32, #tpu.memory_space<vmem>>, vector<32x8xf32>
    tpu.vector_store %arg8[%c0_32, %c0_33], %33 {strides = array<i32>} : memref<32x8xf32, #tpu.memory_space<vmem>>, vector<32x8xf32>,
    return
  }
}

</mosaic_0001>

<llo_original>
// kernel: tpu_custom_call.1
$region0: #{tpu_custom_call.1}
  #allocation0 [shape = 'u32[]', space=smem, size = 0x4, offset = 0x4, fixed_abs, tag = 'smem constant byte address 0x4 - core index']
  #allocation1 [shape = 'u32[144,128]{1,0:T(1,128)}', space=vmem, size = 0x12000, scoped, tag = 'internal scratch']
  %s0 = inlined_call_operand.vmem [shape: f32[32,8], index: 0, kind: input, shape index: {}]
  %s1 = inlined_call_operand.vmem [shape: f32[3,32,32], index: 1, kind: input, shape index: {}]
  %s2 = inlined_call_operand.vmem [shape: f32[24,16], index: 2, kind: input, shape index: {}]
  %s3 = inlined_call_operand.vmem [shape: f32[1,16], index: 3, kind: input, shape index: {}]
  %s4 = inlined_call_operand.vmem [shape: f32[48,32], index: 4, kind: input, shape index: {}]
  %s5 = inlined_call_operand.vmem [shape: f32[1,32], index: 5, kind: input, shape index: {}]
  %s6 = inlined_call_operand.vmem [shape: f32[32,8], index: 6, kind: input, shape index: {}]
  %s7 = inlined_call_operand.vmem [shape: f32[1,8], index: 7, kind: input, shape index: {}]
  %s8 = inlined_call_operand.vmem [shape: f32[32,8], index: 8, kind: output, shape index: {}]
  %s9 = sld [smem:[#allocation0]]
  $region42: #{tpu_custom_call.1} parent=0
    _
  %s11 = ssub.s32 1, %s9
  %s12 = scalar_select 0, %s11, %s9
  // Predicated region
  $region2: #{tpu_custom_call.1} parent=0 // pred_check
    _
  $region3: #{tpu_custom_call.1} parent=0 // pred_check_branch
    %14 = sbr.rel (0) target = $region5
  $region4: #{tpu_custom_call.1} parent=0 // pred_region
    _
  $region5: #{tpu_custom_call.1} parent=0 // pred_fallthru
    _
  // Predicated region
  $region6: #{tpu_custom_call.1} parent=0 // pred_check
    _
  $region7: #{tpu_custom_call.1} parent=0 // pred_check_branch
    %16 = sbr.rel (0) target = $region9
  $region8: #{tpu_custom_call.1} parent=0 // pred_region
    _
  $region9: #{tpu_custom_call.1} parent=0 // pred_fallthru
    _
  // Predicated region
  $region10: #{tpu_custom_call.1} parent=0 // pred_check
    _
  $region11: #{tpu_custom_call.1} parent=0 // pred_check_branch
    %18 = sbr.rel (0) target = $region13
  $region12: #{tpu_custom_call.1} parent=0 // pred_region
    _
  $region13: #{tpu_custom_call.1} parent=0 // pred_fallthru
    _
  // Predicated region
  $region14: #{tpu_custom_call.1} parent=0 // pred_check
    _
  $region15: #{tpu_custom_call.1} parent=0 // pred_check_branch
    %20 = sbr.rel (0) target = $region17
  $region16: #{tpu_custom_call.1} parent=0 // pred_region
    _
  $region17: #{tpu_custom_call.1} parent=0 // pred_fallthru
    _
  // Predicated region
  $region18: #{tpu_custom_call.1} parent=0 // pred_check
    _
  $region19: #{tpu_custom_call.1} parent=0 // pred_check_branch
    %22 = sbr.rel (0) target = $region21
  $region20: #{tpu_custom_call.1} parent=0 // pred_region
    _
  $region21: #{tpu_custom_call.1} parent=0 // pred_fallthru
    _
  // Predicated region
  $region22: #{tpu_custom_call.1} parent=0 // pred_check
    _
  $region23: #{tpu_custom_call.1} parent=0 // pred_check_branch
    %24 = sbr.rel (0) target = $region25
  $region24: #{tpu_custom_call.1} parent=0 // pred_region
    _
  $region25: #{tpu_custom_call.1} parent=0 // pred_fallthru
    _
  // Predicated region
  $region26: #{tpu_custom_call.1} parent=0 // pred_check
    _
  $region27: #{tpu_custom_call.1} parent=0 // pred_check_branch
    %26 = sbr.rel (0) target = $region29
  $region28: #{tpu_custom_call.1} parent=0 // pred_region
    _
  $region29: #{tpu_custom_call.1} parent=0 // pred_fallthru
    _
  // Predicated region
  $region30: #{tpu_custom_call.1} parent=0 // pred_check
    _
  $region31: #{tpu_custom_call.1} parent=0 // pred_check_branch
    %28 = sbr.rel (0) target = $region33
  $region32: #{tpu_custom_call.1} parent=0 // pred_region
    _
  $region33: #{tpu_custom_call.1} parent=0 // pred_fallthru
    _
  %v29 = vld [vmem:[%s0] sm:$0xff]
  %v30 = vld [vmem:[%s0 + $0x8] sm:$0xff]
  %v31 = vld [vmem:[%s0 + $0x10] sm:$0xff]
  %v32 = vld [vmem:[%s0 + $0x18] sm:$0xff]
  %v33 = vld [vmem:[%s1] sm:$0xff]
  %v34 = vld [vmem:[%s1 + $0x8] sm:$0xff]
  %v35 = vld [vmem:[%s1 + $0x10] sm:$0xff]
  %v36 = vld [vmem:[%s1 + $0x18] sm:$0xff]
  %vm37 = vcmask 261120
  %v39 = vsel %vm37, %v33, 0
  %v42 = vsel %vm37, %v34, 0
  %v45 = vsel %vm37, %v35, 0
  %v48 = vsel %vm37, %v36, 0
  %50 = vmatprep.subr.mxu0 0.0
  %51 = vmatpush1.msra.mxu0 %v29
  %52 = vmatprep.subr.mxu0 0.0
  %53 = vmatpush1.msra.mxu0 %v30
  %54 = vmatprep.subr.mxu0 0.0
  %55 = vmatpush1.msra.mxu0 %v31
  %56 = vmatprep.subr.mxu0 0.0
  %57 = vmatpush1.msra.mxu0 %v32
  %58 = vmatprep.subr.mxu0 0.0
  %59 = vmatpush1.msra.mxu0 0.0
  %60 = vmatprep.subr.mxu0 0.0
  %61 = vmatpush1.msra.mxu0 0.0
  %62 = vmatprep.subr.mxu0 0.0
  %63 = vmatpush1.msra.mxu0 0.0
  %64 = vmatprep.subr.mxu0 0.0
  %65 = vmatpush1.msra.mxu0 0.0
  %66 = vmatprep.subr.mxu0 0.0
  %67 = vmatpush1.msra.mxu0 0.0
  %68 = vmatprep.subr.mxu0 0.0
  %69 = vmatpush1.msra.mxu0 0.0
  %70 = vmatprep.subr.mxu0 0.0
  %71 = vmatpush1.msra.mxu0 0.0
  %72 = vmatprep.subr.mxu0 0.0
  %73 = vmatpush1.msra.mxu0 0.0
  %74 = vmatprep.subr.mxu0 0.0
  %75 = vmatpush1.msra.mxu0 0.0
  %76 = vmatprep.subr.mxu0 0.0
  %77 = vmatpush1.msra.mxu0 0.0
  %78 = vmatprep.subr.mxu0 0.0
  %79 = vmatpush1.msra.mxu0 0.0
  %80 = vmatprep.subr.mxu0 0.0
  %81 = vmatpush1.msra.mxu0 0.0
  %82 = vmatprep.subr.mxu0 0.0
  %83 = vmatpush1.msra.mxu0 0.0
  %84 = vmatprep.subr.mxu0 0.0
  %85 = vmatpush1.msra.mxu0 0.0
  %86 = vmatprep.subr.mxu0 0.0
  %87 = vmatpush1.msra.mxu0 0.0
  %88 = vmatprep.subr.mxu0 0.0
  %89 = vmatpush1.msra.mxu0 0.0
  %90 = vmatprep.subr.mxu0 0.0
  %91 = vmatpush1.msra.mxu0 0.0
  %92 = vmatprep.subr.mxu0 0.0
  %93 = vmatpush1.msra.mxu0 0.0
  %94 = vmatprep.subr.mxu0 0.0
  %95 = vmatpush1.msra.mxu0 0.0
  %96 = vmatprep.subr.mxu0 0.0
  %97 = vmatpush1.msra.mxu0 0.0
  %98 = vmatprep.subr.mxu0 0.0
  %99 = vmatpush1.msra.mxu0 0.0
  %100 = vmatprep.subr.mxu0 0.0
  %101 = vmatpush1.msra.mxu0 0.0
  %102 = vmatprep.subr.mxu0 0.0
  %103 = vmatpush1.msra.mxu0 0.0
  %104 = vmatprep.subr.mxu0 0.0
  %105 = vmatpush1.msra.mxu0 0.0
  %106 = vmatprep.subr.mxu0 0.0
  %107 = vmatpush1.msra.mxu0 0.0
  %108 = vmatprep.subr.mxu0 0.0
  %109 = vmatpush1.msra.mxu0 0.0
  %110 = vmatprep.subr.mxu0 0.0
  %111 = vmatpush1.msra.mxu0 0.0
  %112 = vmatprep.subr.mxu0 0.0
  %113 = vmatpush1.msra.mxu0 0.0
  %114 = vmatprep.mubr.f32.mxu0 0.0
  %115 = vmatmul.mubr.f32.gmra.mrb[0].mxu0 %v39
  %v116 = vpop.f32.mrb[0].mxu0
  %v117 = vadd.f32 0.0, %v116
  %v118 = vpop.f32.mrb[0].mxu0
  %119 = vmatprep.mubr.f32.mxu0 0.0
  %120 = vmatmul.mubr.f32.gmra.mrb[0].mxu0 %v42
  %v121 = vpop.f32.mrb[0].mxu0
  %v122 = vadd.f32 0.0, %v121
  %v123 = vpop.f32.mrb[0].mxu0
  %124 = vmatprep.mubr.f32.mxu0 0.0
  %125 = vmatmul.mubr.f32.gmra.mrb[0].mxu0 %v45
  %v126 = vpop.f32.mrb[0].mxu0
  %v127 = vadd.f32 0.0, %v126
  %v128 = vpop.f32.mrb[0].mxu0
  %129 = vmatprep.mubr.f32.mxu0 0.0
  %130 = vmatmul.mubr.f32.gmra.mrb[0].mxu0 %v48
  %v131 = vpop.f32.mrb[0].mxu0
  %v132 = vadd.f32 0.0, %v131
  %v133 = vpop.f32.mrb[0].mxu0
  %134 = vdwg.mxu0
  %s135 = scalar_lea.vmem %s1, 64
  %v136 = vld [vmem:[%s135] sm:$0xff]
  %v137 = vld [vmem:[%s135 + $0x8] sm:$0xff]
  %v138 = vld [vmem:[%s135 + $0x10] sm:$0xff]
  %v139 = vld [vmem:[%s135 + $0x18] sm:$0xff]
  %v141 = vsel %vm37, %v136, 0
  %v144 = vsel %vm37, %v137, 0
  %v147 = vsel %vm37, %v138, 0
  %v150 = vsel %vm37, %v139, 0
  %152 = vmatprep.subr.mxu0 0.0
  %153 = vmatpush1.msra.mxu0 %v29
  %154 = vmatprep.subr.mxu0 0.0
  %155 = vmatpush1.msra.mxu0 %v30
  %156 = vmatprep.subr.mxu0 0.0
  %157 = vmatpush1.msra.mxu0 %v31
  %158 = vmatprep.subr.mxu0 0.0
  %159 = vmatpush1.msra.mxu0 %v32
  %160 = vmatprep.subr.mxu0 0.0
  %161 = vmatpush1.msra.mxu0 0.0
  %162 = vmatprep.subr.mxu0 0.0
  %163 = vmatpush1.msra.mxu0 0.0
  %164 = vmatprep.subr.mxu0 0.0
  %165 = vmatpush1.msra.mxu0 0.0
  %166 = vmatprep.subr.mxu0 0.0
  %167 = vmatpush1.msra.mxu0 0.0
  %168 = vmatprep.subr.mxu0 0.0
  %169 = vmatpush1.msra.mxu0 0.0
  %170 = vmatprep.subr.mxu0 0.0
  %171 = vmatpush1.msra.mxu0 0.0
  %172 = vmatprep.subr.mxu0 0.0
  %173 = vmatpush1.msra.mxu0 0.0
  %174 = vmatprep.subr.mxu0 0.0
  %175 = vmatpush1.msra.mxu0 0.0
  %176 = vmatprep.subr.mxu0 0.0
  %177 = vmatpush1.msra.mxu0 0.0
  %178 = vmatprep.subr.mxu0 0.0
  %179 = vmatpush1.msra.mxu0 0.0
  %180 = vmatprep.subr.mxu0 0.0
  %181 = vmatpush1.msra.mxu0 0.0
  %182 = vmatprep.subr.mxu0 0.0
  %183 = vmatpush1.msra.mxu0 0.0
  %184 = vmatprep.subr.mxu0 0.0
  %185 = vmatpush1.msra.mxu0 0.0
  %186 = vmatprep.subr.mxu0 0.0
  %187 = vmatpush1.msra.mxu0 0.0
  %188 = vmatprep.subr.mxu0 0.0
  %189 = vmatpush1.msra.mxu0 0.0
  %190 = vmatprep.subr.mxu0 0.0
  %191 = vmatpush1.msra.mxu0 0.0
  %192 = vmatprep.subr.mxu0 0.0
  %193 = vmatpush1.msra.mxu0 0.0
  %194 = vmatprep.subr.mxu0 0.0
  %195 = vmatpush1.msra.mxu0 0.0
  %196 = vmatprep.subr.mxu0 0.0
  %197 = vmatpush1.msra.mxu0 0.0
  %198 = vmatprep.subr.mxu0 0.0
  %199 = vmatpush1.msra.mxu0 0.0
  %200 = vmatprep.subr.mxu0 0.0
  %201 = vmatpush1.msra.mxu0 0.0
  %202 = vmatprep.subr.mxu0 0.0
  %203 = vmatpush1.msra.mxu0 0.0
  %204 = vmatprep.subr.mxu0 0.0
  %205 = vmatpush1.msra.mxu0 0.0
  %206 = vmatprep.subr.mxu0 0.0
  %207 = vmatpush1.msra.mxu0 0.0
  %208 = vmatprep.subr.mxu0 0.0
  %209 = vmatpush1.msra.mxu0 0.0
  %210 = vmatprep.subr.mxu0 0.0
  %211 = vmatpush1.msra.mxu0 0.0
  %212 = vmatprep.subr.mxu0 0.0
  %213 = vmatpush1.msra.mxu0 0.0
  %214 = vmatprep.subr.mxu0 0.0
  %215 = vmatpush1.msra.mxu0 0.0
  %216 = vmatprep.mubr.f32.mxu0 0.0
  %217 = vmatmul.mubr.f32.gmra.mrb[0].mxu0 %v141
  %v218 = vpop.f32.mrb[0].mxu0
  %v219 = vadd.f32 0.0, %v218
  %v220 = vpop.f32.mrb[0].mxu0
  %221 = vmatprep.mubr.f32.mxu0 0.0
  %222 = vmatmul.mubr.f32.gmra.mrb[0].mxu0 %v144
  %v223 = vpop.f32.mrb[0].mxu0
  %v224 = vadd.f32 0.0, %v223
  %v225 = vpop.f32.mrb[0].mxu0
  %226 = vmatprep.mubr.f32.mxu0 0.0
  %227 = vmatmul.mubr.f32.gmra.mrb[0].mxu0 %v147
  %v228 = vpop.f32.mrb[0].mxu0
  %v229 = vadd.f32 0.0, %v228
  %v230 = vpop.f32.mrb[0].mxu0
  %231 = vmatprep.mubr.f32.mxu0 0.0
  %232 = vmatmul.mubr.f32.gmra.mrb[0].mxu0 %v150
  %v233 = vpop.f32.mrb[0].mxu0
  %v234 = vadd.f32 0.0, %v233
  %v235 = vpop.f32.mrb[0].mxu0
  %236 = vdwg.mxu0
  %241 = vrot.lane.b32.xlu0 %v29, 8
  %v242 = vpop.permute.xlu0 %241
  %243 = vrot.lane.b32.xlu0 %v30, 8
  %v244 = vpop.permute.xlu0 %243
  %245 = vrot.lane.b32.xlu0 %v31, 8
  %v246 = vpop.permute.xlu0 %245
  %247 = vrot.lane.b32.xlu0 %v32, 8
  %v248 = vpop.permute.xlu0 %247
  %257 = vrot.lane.b32.xlu0 %v219, 16
  %v258 = vpop.permute.xlu0 %257
  %259 = vrot.lane.b32.xlu0 %v224, 16
  %v260 = vpop.permute.xlu0 %259
  %261 = vrot.lane.b32.xlu0 %v229, 16
  %v262 = vpop.permute.xlu0 %261
  %263 = vrot.lane.b32.xlu0 %v234, 16
  %v264 = vpop.permute.xlu0 %263
  %vm269 = vcmask 64512
  %v270 = vsel %vm269, %v117, %v242
  %v271 = vsel %vm269, %v122, %v244
  %v272 = vsel %vm269, %v127, %v246
  %v273 = vsel %vm269, %v132, %v248
  %vm274 = vcmask 130048
  %v275 = vsel %vm274, %v270, %v258
  %v276 = vsel %vm274, %v271, %v260
  %v277 = vsel %vm274, %v272, %v262
  %v278 = vsel %vm274, %v273, %v264
  %v279 = vld [vmem:[%s2] sm:$0xff]
  %v280 = vld [vmem:[%s2 + $0x8] sm:$0xff]
  %v281 = vld [vmem:[%s2 + $0x10] sm:$0xff]
  %v282 = vld [vmem:[%s3] sm:$0x1]
  %v284 = vlaneseq
  %v285 = vshrl.u32 %v284, 7
  %v286 = vsub.s32 0, %v285
  %v287 = vrot.slane %v282, %v286
  %vm289 = vcmask 195584
  %v291 = vsel %vm289, %v275, 0
  %v294 = vsel %vm289, %v276, 0
  %v297 = vsel %vm289, %v277, 0
  %v300 = vsel %vm289, %v278, 0
  %302 = vmatprep.subr.mxu0 0.0
  %303 = vmatpush1.msra.mxu0 %v279
  %304 = vmatprep.subr.mxu0 0.0
  %305 = vmatpush1.msra.mxu0 %v280
  %306 = vmatprep.subr.mxu0 0.0
  %307 = vmatpush1.msra.mxu0 %v281
  %308 = vmatprep.subr.mxu0 0.0
  %309 = vmatpush1.msra.mxu0 0.0
  %310 = vmatprep.subr.mxu0 0.0
  %311 = vmatpush1.msra.mxu0 0.0
  %312 = vmatprep.subr.mxu0 0.0
  %313 = vmatpush1.msra.mxu0 0.0
  %314 = vmatprep.subr.mxu0 0.0
  %315 = vmatpush1.msra.mxu0 0.0
  %316 = vmatprep.subr.mxu0 0.0
  %317 = vmatpush1.msra.mxu0 0.0
  %318 = vmatprep.subr.mxu0 0.0
  %319 = vmatpush1.msra.mxu0 0.0
  %320 = vmatprep.subr.mxu0 0.0
  %321 = vmatpush1.msra.mxu0 0.0
  %322 = vmatprep.subr.mxu0 0.0
  %323 = vmatpush1.msra.mxu0 0.0
  %324 = vmatprep.subr.mxu0 0.0
  %325 = vmatpush1.msra.mxu0 0.0
  %326 = vmatprep.subr.mxu0 0.0
  %327 = vmatpush1.msra.mxu0 0.0
  %328 = vmatprep.subr.mxu0 0.0
  %329 = vmatpush1.msra.mxu0 0.0
  %330 = vmatprep.subr.mxu0 0.0
  %331 = vmatpush1.msra.mxu0 0.0
  %332 = vmatprep.subr.mxu0 0.0
  %333 = vmatpush1.msra.mxu0 0.0
  %334 = vmatprep.subr.mxu0 0.0
  %335 = vmatpush1.msra.mxu0 0.0
  %336 = vmatprep.subr.mxu0 0.0
  %337 = vmatpush1.msra.mxu0 0.0
  %338 = vmatprep.subr.mxu0 0.0
  %339 = vmatpush1.msra.mxu0 0.0
  %340 = vmatprep.subr.mxu0 0.0
  %341 = vmatpush1.msra.mxu0 0.0
  %342 = vmatprep.subr.mxu0 0.0
  %343 = vmatpush1.msra.mxu0 0.0
  %344 = vmatprep.subr.mxu0 0.0
  %345 = vmatpush1.msra.mxu0 0.0
  %346 = vmatprep.subr.mxu0 0.0
  %347 = vmatpush1.msra.mxu0 0.0
  %348 = vmatprep.subr.mxu0 0.0
  %349 = vmatpush1.msra.mxu0 0.0
  %350 = vmatprep.subr.mxu0 0.0
  %351 = vmatpush1.msra.mxu0 0.0
  %352 = vmatprep.subr.mxu0 0.0
  %353 = vmatpush1.msra.mxu0 0.0
  %354 = vmatprep.subr.mxu0 0.0
  %355 = vmatpush1.msra.mxu0 0.0
  %356 = vmatprep.subr.mxu0 0.0
  %357 = vmatpush1.msra.mxu0 0.0
  %358 = vmatprep.subr.mxu0 0.0
  %359 = vmatpush1.msra.mxu0 0.0
  %360 = vmatprep.subr.mxu0 0.0
  %361 = vmatpush1.msra.mxu0 0.0
  %362 = vmatprep.subr.mxu0 0.0
  %363 = vmatpush1.msra.mxu0 0.0
  %364 = vmatprep.subr.mxu0 0.0
  %365 = vmatpush1.msra.mxu0 0.0
  %366 = vmatprep.mubr.f32.mxu0 0.0
  %367 = vmatmul.mubr.f32.gmra.mrb[0].mxu0 %v291
  %v368 = vpop.f32.mrb[0].mxu0
  %v369 = vadd.f32 %v287, %v368
  %v370 = vpop.f32.mrb[0].mxu0
  %371 = vmatprep.mubr.f32.mxu0 0.0
  %372 = vmatmul.mubr.f32.gmra.mrb[0].mxu0 %v294
  %v373 = vpop.f32.mrb[0].mxu0
  %v374 = vadd.f32 %v287, %v373
  %v375 = vpop.f32.mrb[0].mxu0
  %376 = vmatprep.mubr.f32.mxu0 0.0
  %377 = vmatmul.mubr.f32.gmra.mrb[0].mxu0 %v297
  %v378 = vpop.f32.mrb[0].mxu0
  %v379 = vadd.f32 %v287, %v378
  %v380 = vpop.f32.mrb[0].mxu0
  %381 = vmatprep.mubr.f32.mxu0 0.0
  %382 = vmatmul.mubr.f32.gmra.mrb[0].mxu0 %v300
  %v383 = vpop.f32.mrb[0].mxu0
  %v384 = vadd.f32 %v287, %v383
  %v385 = vpop.f32.mrb[0].mxu0
  %386 = vdwg.mxu0
  %v387 = vmax.f32 %v369, 0.0
  %v388 = vmax.f32 %v374, 0.0
  %v389 = vmax.f32 %v379, 0.0
  %v390 = vmax.f32 %v384, 0.0
  %391 = vmatprep.subr.mxu0 0.0
  %392 = vmatpush1.msra.mxu0 %v387
  %393 = vmatprep.subr.mxu0 0.0
  %394 = vmatpush1.msra.mxu0 %v388
  %395 = vmatprep.subr.mxu0 0.0
  %396 = vmatpush1.msra.mxu0 %v389
  %397 = vmatprep.subr.mxu0 0.0
  %398 = vmatpush1.msra.mxu0 %v390
  %399 = vmatprep.subr.mxu0 0.0
  %400 = vmatpush1.msra.mxu0 0.0
  %401 = vmatprep.subr.mxu0 0.0
  %402 = vmatpush1.msra.mxu0 0.0
  %403 = vmatprep.subr.mxu0 0.0
  %404 = vmatpush1.msra.mxu0 0.0
  %405 = vmatprep.subr.mxu0 0.0
  %406 = vmatpush1.msra.mxu0 0.0
  %407 = vmatprep.subr.mxu0 0.0
  %408 = vmatpush1.msra.mxu0 0.0
  %409 = vmatprep.subr.mxu0 0.0
  %410 = vmatpush1.msra.mxu0 0.0
  %411 = vmatprep.subr.mxu0 0.0
  %412 = vmatpush1.msra.mxu0 0.0
  %413 = vmatprep.subr.mxu0 0.0
  %414 = vmatpush1.msra.mxu0 0.0
  %415 = vmatprep.subr.mxu0 0.0
  %416 = vmatpush1.msra.mxu0 0.0
  %417 = vmatprep.subr.mxu0 0.0
  %418 = vmatpush1.msra.mxu0 0.0
  %419 = vmatprep.subr.mxu0 0.0
  %420 = vmatpush1.msra.mxu0 0.0
  %421 = vmatprep.subr.mxu0 0.0
  %422 = vmatpush1.msra.mxu0 0.0
  %423 = vmatprep.subr.mxu0 0.0
  %424 = vmatpush1.msra.mxu0 0.0
  %425 = vmatprep.subr.mxu0 0.0
  %426 = vmatpush1.msra.mxu0 0.0
  %427 = vmatprep.subr.mxu0 0.0
  %428 = vmatpush1.msra.mxu0 0.0
  %429 = vmatprep.subr.mxu0 0.0
  %430 = vmatpush1.msra.mxu0 0.0
  %431 = vmatprep.subr.mxu0 0.0
  %432 = vmatpush1.msra.mxu0 0.0
  %433 = vmatprep.subr.mxu0 0.0
  %434 = vmatpush1.msra.mxu0 0.0
  %435 = vmatprep.subr.mxu0 0.0
  %436 = vmatpush1.msra.mxu0 0.0
  %437 = vmatprep.subr.mxu0 0.0
  %438 = vmatpush1.msra.mxu0 0.0
  %439 = vmatprep.subr.mxu0 0.0
  %440 = vmatpush1.msra.mxu0 0.0
  %441 = vmatprep.subr.mxu0 0.0
  %442 = vmatpush1.msra.mxu0 0.0
  %443 = vmatprep.subr.mxu0 0.0
  %444 = vmatpush1.msra.mxu0 0.0
  %445 = vmatprep.subr.mxu0 0.0
  %446 = vmatpush1.msra.mxu0 0.0
  %447 = vmatprep.subr.mxu0 0.0
  %448 = vmatpush1.msra.mxu0 0.0
  %449 = vmatprep.subr.mxu0 0.0
  %450 = vmatpush1.msra.mxu0 0.0
  %451 = vmatprep.subr.mxu0 0.0
  %452 = vmatpush1.msra.mxu0 0.0
  %453 = vmatprep.subr.mxu0 0.0
  %454 = vmatpush1.msra.mxu0 0.0
  %455 = vmatprep.mubr.f32.mxu0 0.0
  %456 = vmatmul.mubr.f32.gmra.mrb[0].mxu0 %v39
  %v457 = vpop.f32.mrb[0].mxu0
  %v458 = vadd.f32 0.0, %v457
  %v459 = vpop.f32.mrb[0].mxu0
  %460 = vmatprep.mubr.f32.mxu0 0.0
  %461 = vmatmul.mubr.f32.gmra.mrb[0].mxu0 %v42
  %v462 = vpop.f32.mrb[0].mxu0
  %v463 = vadd.f32 0.0, %v462
  %v464 = vpop.f32.mrb[0].mxu0
  %465 = vmatprep.mubr.f32.mxu0 0.0
  %466 = vmatmul.mubr.f32.gmra.mrb[0].mxu0 %v45
  %v467 = vpop.f32.mrb[0].mxu0
  %v468 = vadd.f32 0.0, %v467
  %v469 = vpop.f32.mrb[0].mxu0
  %470 = vmatprep.mubr.f32.mxu0 0.0
  %471 = vmatmul.mubr.f32.gmra.mrb[0].mxu0 %v48
  %v472 = vpop.f32.mrb[0].mxu0
  %v473 = vadd.f32 0.0, %v472
  %v474 = vpop.f32.mrb[0].mxu0
  %475 = vdwg.mxu0
  %476 = vmatprep.subr.mxu0 0.0
  %477 = vmatpush1.msra.mxu0 %v387
  %478 = vmatprep.subr.mxu0 0.0
  %479 = vmatpush1.msra.mxu0 %v388
  %480 = vmatprep.subr.mxu0 0.0
  %481 = vmatpush1.msra.mxu0 %v389
  %482 = vmatprep.subr.mxu0 0.0
  %483 = vmatpush1.msra.mxu0 %v390
  %484 = vmatprep.subr.mxu0 0.0
  %485 = vmatpush1.msra.mxu0 0.0
  %486 = vmatprep.subr.mxu0 0.0
  %487 = vmatpush1.msra.mxu0 0.0
  %488 = vmatprep.subr.mxu0 0.0
  %489 = vmatpush1.msra.mxu0 0.0
  %490 = vmatprep.subr.mxu0 0.0
  %491 = vmatpush1.msra.mxu0 0.0
  %492 = vmatprep.subr.mxu0 0.0
  %493 = vmatpush1.msra.mxu0 0.0
  %494 = vmatprep.subr.mxu0 0.0
  %495 = vmatpush1.msra.mxu0 0.0
  %496 = vmatprep.subr.mxu0 0.0
  %497 = vmatpush1.msra.mxu0 0.0
  %498 = vmatprep.subr.mxu0 0.0
  %499 = vmatpush1.msra.mxu0 0.0
  %500 = vmatprep.subr.mxu0 0.0
  %501 = vmatpush1.msra.mxu0 0.0
  %502 = vmatprep.subr.mxu0 0.0
  %503 = vmatpush1.msra.mxu0 0.0
  %504 = vmatprep.subr.mxu0 0.0
  %505 = vmatpush1.msra.mxu0 0.0
  %506 = vmatprep.subr.mxu0 0.0
  %507 = vmatpush1.msra.mxu0 0.0
  %508 = vmatprep.subr.mxu0 0.0
  %509 = vmatpush1.msra.mxu0 0.0
  %510 = vmatprep.subr.mxu0 0.0
  %511 = vmatpush1.msra.mxu0 0.0
  %512 = vmatprep.subr.mxu0 0.0
  %513 = vmatpush1.msra.mxu0 0.0
  %514 = vmatprep.subr.mxu0 0.0
  %515 = vmatpush1.msra.mxu0 0.0
  %516 = vmatprep.subr.mxu0 0.0
  %517 = vmatpush1.msra.mxu0 0.0
  %518 = vmatprep.subr.mxu0 0.0
  %519 = vmatpush1.msra.mxu0 0.0
  %520 = vmatprep.subr.mxu0 0.0
  %521 = vmatpush1.msra.mxu0 0.0
  %522 = vmatprep.subr.mxu0 0.0
  %523 = vmatpush1.msra.mxu0 0.0
  %524 = vmatprep.subr.mxu0 0.0
  %525 = vmatpush1.msra.mxu0 0.0
  %526 = vmatprep.subr.mxu0 0.0
  %527 = vmatpush1.msra.mxu0 0.0
  %528 = vmatprep.subr.mxu0 0.0
  %529 = vmatpush1.msra.mxu0 0.0
  %530 = vmatprep.subr.mxu0 0.0
  %531 = vmatpush1.msra.mxu0 0.0
  %532 = vmatprep.subr.mxu0 0.0
  %533 = vmatpush1.msra.mxu0 0.0
  %534 = vmatprep.subr.mxu0 0.0
  %535 = vmatpush1.msra.mxu0 0.0
  %536 = vmatprep.subr.mxu0 0.0
  %537 = vmatpush1.msra.mxu0 0.0
  %538 = vmatprep.subr.mxu0 0.0
  %539 = vmatpush1.msra.mxu0 0.0
  %540 = vmatprep.mubr.f32.mxu0 0.0
  %541 = vmatmul.mubr.f32.gmra.mrb[0].mxu0 %v141
  %v542 = vpop.f32.mrb[0].mxu0
  %v543 = vadd.f32 0.0, %v542
  %v544 = vpop.f32.mrb[0].mxu0
  %545 = vmatprep.mubr.f32.mxu0 0.0
  %546 = vmatmul.mubr.f32.gmra.mrb[0].mxu0 %v144
  %v547 = vpop.f32.mrb[0].mxu0
  %v548 = vadd.f32 0.0, %v547
  %v549 = vpop.f32.mrb[0].mxu0
  %550 = vmatprep.mubr.f32.mxu0 0.0
  %551 = vmatmul.mubr.f32.gmra.mrb[0].mxu0 %v147
  %v552 = vpop.f32.mrb[0].mxu0
  %v553 = vadd.f32 0.0, %v552
  %v554 = vpop.f32.mrb[0].mxu0
  %555 = vmatprep.mubr.f32.mxu0 0.0
  %556 = vmatmul.mubr.f32.gmra.mrb[0].mxu0 %v150
  %v557 = vpop.f32.mrb[0].mxu0
  %v558 = vadd.f32 0.0, %v557
  %v559 = vpop.f32.mrb[0].mxu0
  %560 = vdwg.mxu0
  %565 = vrot.lane.b32.xlu0 %v387, 16
  %v566 = vpop.permute.xlu0 %565
  %567 = vrot.lane.b32.xlu0 %v388, 16
  %v568 = vpop.permute.xlu0 %567
  %569 = vrot.lane.b32.xlu0 %v389, 16
  %v570 = vpop.permute.xlu0 %569
  %571 = vrot.lane.b32.xlu0 %v390, 16
  %v572 = vpop.permute.xlu0 %571
  %581 = vrot.lane.b32.xlu0 %v543, 32
  %v582 = vpop.permute.xlu0 %581
  %583 = vrot.lane.b32.xlu0 %v548, 32
  %v584 = vpop.permute.xlu0 %583
  %585 = vrot.lane.b32.xlu0 %v553, 32
  %v586 = vpop.permute.xlu0 %585
  %587 = vrot.lane.b32.xlu0 %v558, 32
  %v588 = vpop.permute.xlu0 %587
  %v593 = vsel %vm274, %v458, %v566
  %v594 = vsel %vm274, %v463, %v568
  %v595 = vsel %vm274, %v468, %v570
  %v596 = vsel %vm274, %v473, %v572
  %v597 = vsel %vm37, %v593, %v582
  %v598 = vsel %vm37, %v594, %v584
  %v599 = vsel %vm37, %v595, %v586
  %v600 = vsel %vm37, %v596, %v588
  %v601 = vld [vmem:[%s4] sm:$0xff]
  %v602 = vld [vmem:[%s4 + $0x8] sm:$0xff]
  %v603 = vld [vmem:[%s4 + $0x10] sm:$0xff]
  %v604 = vld [vmem:[%s4 + $0x18] sm:$0xff]
  %v605 = vld [vmem:[%s4 + $0x20] sm:$0xff]
  %v606 = vld [vmem:[%s4 + $0x28] sm:$0xff]
  %v607 = vld [vmem:[%s5] sm:$0x1]
  %v609 = vlaneseq
  %v610 = vshrl.u32 %v609, 7
  %v611 = vsub.s32 0, %v610
  %v612 = vrot.slane %v607, %v611
  %vm614 = vcmask 392192
  %v616 = vsel %vm614, %v597, 0
  %v619 = vsel %vm614, %v598, 0
  %v622 = vsel %vm614, %v599, 0
  %v625 = vsel %vm614, %v600, 0
  %627 = vmatprep.subr.mxu0 0.0
  %628 = vmatpush1.msra.mxu0 %v601
  %629 = vmatprep.subr.mxu0 0.0
  %630 = vmatpush1.msra.mxu0 %v602
  %631 = vmatprep.subr.mxu0 0.0
  %632 = vmatpush1.msra.mxu0 %v603
  %633 = vmatprep.subr.mxu0 0.0
  %634 = vmatpush1.msra.mxu0 %v604
  %635 = vmatprep.subr.mxu0 0.0
  %636 = vmatpush1.msra.mxu0 %v605
  %637 = vmatprep.subr.mxu0 0.0
  %638 = vmatpush1.msra.mxu0 %v606
  %639 = vmatprep.subr.mxu0 0.0
  %640 = vmatpush1.msra.mxu0 0.0
  %641 = vmatprep.subr.mxu0 0.0
  %642 = vmatpush1.msra.mxu0 0.0
  %643 = vmatprep.subr.mxu0 0.0
  %644 = vmatpush1.msra.mxu0 0.0
  %645 = vmatprep.subr.mxu0 0.0
  %646 = vmatpush1.msra.mxu0 0.0
  %647 = vmatprep.subr.mxu0 0.0
  %648 = vmatpush1.msra.mxu0 0.0
  %649 = vmatprep.subr.mxu0 0.0
  %650 = vmatpush1.msra.mxu0 0.0
  %651 = vmatprep.subr.mxu0 0.0
  %652 = vmatpush1.msra.mxu0 0.0
  %653 = vmatprep.subr.mxu0 0.0
  %654 = vmatpush1.msra.mxu0 0.0
  %655 = vmatprep.subr.mxu0 0.0
  %656 = vmatpush1.msra.mxu0 0.0
  %657 = vmatprep.subr.mxu0 0.0
  %658 = vmatpush1.msra.mxu0 0.0
  %659 = vmatprep.subr.mxu0 0.0
  %660 = vmatpush1.msra.mxu0 0.0
  %661 = vmatprep.subr.mxu0 0.0
  %662 = vmatpush1.msra.mxu0 0.0
  %663 = vmatprep.subr.mxu0 0.0
  %664 = vmatpush1.msra.mxu0 0.0
  %665 = vmatprep.subr.mxu0 0.0
  %666 = vmatpush1.msra.mxu0 0.0
  %667 = vmatprep.subr.mxu0 0.0
  %668 = vmatpush1.msra.mxu0 0.0
  %669 = vmatprep.subr.mxu0 0.0
  %670 = vmatpush1.msra.mxu0 0.0
  %671 = vmatprep.subr.mxu0 0.0
  %672 = vmatpush1.msra.mxu0 0.0
  %673 = vmatprep.subr.mxu0 0.0
  %674 = vmatpush1.msra.mxu0 0.0
  %675 = vmatprep.subr.mxu0 0.0
  %676 = vmatpush1.msra.mxu0 0.0
  %677 = vmatprep.subr.mxu0 0.0
  %678 = vmatpush1.msra.mxu0 0.0
  %679 = vmatprep.subr.mxu0 0.0
  %680 = vmatpush1.msra.mxu0 0.0
  %681 = vmatprep.subr.mxu0 0.0
  %682 = vmatpush1.msra.mxu0 0.0
  %683 = vmatprep.subr.mxu0 0.0
  %684 = vmatpush1.msra.mxu0 0.0
  %685 = vmatprep.subr.mxu0 0.0
  %686 = vmatpush1.msra.mxu0 0.0
  %687 = vmatprep.subr.mxu0 0.0
  %688 = vmatpush1.msra.mxu0 0.0
  %689 = vmatprep.subr.mxu0 0.0
  %690 = vmatpush1.msra.mxu0 0.0
  %691 = vmatprep.mubr.f32.mxu0 0.0
  %692 = vmatmul.mubr.f32.gmra.mrb[0].mxu0 %v616
  %v693 = vpop.f32.mrb[0].mxu0
  %v694 = vadd.f32 %v612, %v693
  %v695 = vpop.f32.mrb[0].mxu0
  %696 = vmatprep.mubr.f32.mxu0 0.0
  %697 = vmatmul.mubr.f32.gmra.mrb[0].mxu0 %v619
  %v698 = vpop.f32.mrb[0].mxu0
  %v699 = vadd.f32 %v612, %v698
  %v700 = vpop.f32.mrb[0].mxu0
  %701 = vmatprep.mubr.f32.mxu0 0.0
  %702 = vmatmul.mubr.f32.gmra.mrb[0].mxu0 %v622
  %v703 = vpop.f32.mrb[0].mxu0
  %v704 = vadd.f32 %v612, %v703
  %v705 = vpop.f32.mrb[0].mxu0
  %706 = vmatprep.mubr.f32.mxu0 0.0
  %707 = vmatmul.mubr.f32.gmra.mrb[0].mxu0 %v625
  %v708 = vpop.f32.mrb[0].mxu0
  %v709 = vadd.f32 %v612, %v708
  %v710 = vpop.f32.mrb[0].mxu0
  %711 = vdwg.mxu0
  %v712 = vmax.f32 %v694, 0.0
  %v713 = vmax.f32 %v699, 0.0
  %v714 = vmax.f32 %v704, 0.0
  %v715 = vmax.f32 %v709, 0.0
  %v716 = vld [vmem:[%s6] sm:$0xff]
  %v717 = vld [vmem:[%s6 + $0x8] sm:$0xff]
  %v718 = vld [vmem:[%s6 + $0x10] sm:$0xff]
  %v719 = vld [vmem:[%s6 + $0x18] sm:$0xff]
  %v720 = vld [vmem:[%s7] sm:$0x1]
  %v722 = vlaneseq
  %v723 = vshrl.u32 %v722, 7
  %v724 = vsub.s32 0, %v723
  %v725 = vrot.slane %v720, %v724
  %v728 = vsel %vm37, %v712, 0
  %v731 = vsel %vm37, %v713, 0
  %v734 = vsel %vm37, %v714, 0
  %v737 = vsel %vm37, %v715, 0
  %739 = vmatprep.subr.mxu0 0.0
  %740 = vmatpush1.msra.mxu0 %v716
  %741 = vmatprep.subr.mxu0 0.0
  %742 = vmatpush1.msra.mxu0 %v717
  %743 = vmatprep.subr.mxu0 0.0
  %744 = vmatpush1.msra.mxu0 %v718
  %745 = vmatprep.subr.mxu0 0.0
  %746 = vmatpush1.msra.mxu0 %v719
  %747 = vmatprep.subr.mxu0 0.0
  %748 = vmatpush1.msra.mxu0 0.0
  %749 = vmatprep.subr.mxu0 0.0
  %750 = vmatpush1.msra.mxu0 0.0
  %751 = vmatprep.subr.mxu0 0.0
  %752 = vmatpush1.msra.mxu0 0.0
  %753 = vmatprep.subr.mxu0 0.0
  %754 = vmatpush1.msra.mxu0 0.0
  %755 = vmatprep.subr.mxu0 0.0
  %756 = vmatpush1.msra.mxu0 0.0
  %757 = vmatprep.subr.mxu0 0.0
  %758 = vmatpush1.msra.mxu0 0.0
  %759 = vmatprep.subr.mxu0 0.0
  %760 = vmatpush1.msra.mxu0 0.0
  %761 = vmatprep.subr.mxu0 0.0
  %762 = vmatpush1.msra.mxu0 0.0
  %763 = vmatprep.subr.mxu0 0.0
  %764 = vmatpush1.msra.mxu0 0.0
  %765 = vmatprep.subr.mxu0 0.0
  %766 = vmatpush1.msra.mxu0 0.0
  %767 = vmatprep.subr.mxu0 0.0
  %768 = vmatpush1.msra.mxu0 0.0
  %769 = vmatprep.subr.mxu0 0.0
  %770 = vmatpush1.msra.mxu0 0.0
  %771 = vmatprep.subr.mxu0 0.0
  %772 = vmatpush1.msra.mxu0 0.0
  %773 = vmatprep.subr.mxu0 0.0
  %774 = vmatpush1.msra.mxu0 0.0
  %775 = vmatprep.subr.mxu0 0.0
  %776 = vmatpush1.msra.mxu0 0.0
  %777 = vmatprep.subr.mxu0 0.0
  %778 = vmatpush1.msra.mxu0 0.0
  %779 = vmatprep.subr.mxu0 0.0
  %780 = vmatpush1.msra.mxu0 0.0
  %781 = vmatprep.subr.mxu0 0.0
  %782 = vmatpush1.msra.mxu0 0.0
  %783 = vmatprep.subr.mxu0 0.0
  %784 = vmatpush1.msra.mxu0 0.0
  %785 = vmatprep.subr.mxu0 0.0
  %786 = vmatpush1.msra.mxu0 0.0
  %787 = vmatprep.subr.mxu0 0.0
  %788 = vmatpush1.msra.mxu0 0.0
  %789 = vmatprep.subr.mxu0 0.0
  %790 = vmatpush1.msra.mxu0 0.0
  %791 = vmatprep.subr.mxu0 0.0
  %792 = vmatpush1.msra.mxu0 0.0
  %793 = vmatprep.subr.mxu0 0.0
  %794 = vmatpush1.msra.mxu0 0.0
  %795 = vmatprep.subr.mxu0 0.0
  %796 = vmatpush1.msra.mxu0 0.0
  %797 = vmatprep.subr.mxu0 0.0
  %798 = vmatpush1.msra.mxu0 0.0
  %799 = vmatprep.subr.mxu0 0.0
  %800 = vmatpush1.msra.mxu0 0.0
  %801 = vmatprep.subr.mxu0 0.0
  %802 = vmatpush1.msra.mxu0 0.0
  %803 = vmatprep.mubr.f32.mxu0 0.0
  %804 = vmatmul.mubr.f32.gmra.mrb[0].mxu0 %v728
  %v805 = vpop.f32.mrb[0].mxu0
  %v806 = vadd.f32 %v725, %v805
  %v807 = vpop.f32.mrb[0].mxu0
  %808 = vmatprep.mubr.f32.mxu0 0.0
  %809 = vmatmul.mubr.f32.gmra.mrb[0].mxu0 %v731
  %v810 = vpop.f32.mrb[0].mxu0
  %v811 = vadd.f32 %v725, %v810
  %v812 = vpop.f32.mrb[0].mxu0
  %813 = vmatprep.mubr.f32.mxu0 0.0
  %814 = vmatmul.mubr.f32.gmra.mrb[0].mxu0 %v734
  %v815 = vpop.f32.mrb[0].mxu0
  %v816 = vadd.f32 %v725, %v815
  %v817 = vpop.f32.mrb[0].mxu0
  %818 = vmatprep.mubr.f32.mxu0 0.0
  %819 = vmatmul.mubr.f32.gmra.mrb[0].mxu0 %v737
  %v820 = vpop.f32.mrb[0].mxu0
  %v821 = vadd.f32 %v725, %v820
  %v822 = vpop.f32.mrb[0].mxu0
  %823 = vdwg.mxu0
  %824 = vst.msk [vmem:[%s8] sm:$0xff] %vm269, %v806
  %825 = vst.msk [vmem:[%s8 + $0x8] sm:$0xff] %vm269, %v811
  %826 = vst.msk [vmem:[%s8 + $0x10] sm:$0xff] %vm269, %v816
  %827 = vst.msk [vmem:[%s8 + $0x18] sm:$0xff] %vm269, %v821
  // Predicated region
  $region34: #{tpu_custom_call.1} parent=0 // pred_check
    _
  $region35: #{tpu_custom_call.1} parent=0 // pred_check_branch
    %829 = sbr.rel (0) target = $region37
  $region36: #{tpu_custom_call.1} parent=0 // pred_region
    _
  $region37: #{tpu_custom_call.1} parent=0 // pred_fallthru
    _
  // Predicated region
  $region38: #{tpu_custom_call.1} parent=0 // pred_check
    _
  $region39: #{tpu_custom_call.1} parent=0 // pred_check_branch
    %831 = sbr.rel (0) target = $region41
  $region40: #{tpu_custom_call.1} parent=0 // pred_region
    _
  $region41: #{tpu_custom_call.1} parent=0 // pred_fallthru
    _

</llo_original>
